<compile_context>
chip_gen: v7x
topology: tpu7x:2x2x1
jax: 0.10.0
libtpu: 0.0.40
codegen_flags: <defaults>
</compile_context>

<pallas_src>
import numpy as np
import jax
import jax.numpy as jnp
from jax.experimental import pallas as pl
from jax.experimental.pallas import tpu as pltpu


# ----------------------------- kernels --------------------------------------

def _theta_proj_kernel(x_ref, theta_ref, y_ref):
    # x_ref:     (1, N*T, F_in)       selected by b
    # theta_ref: (1, F_in, F_out)     selected by k
    # y_ref:     (1, 1, N*T, F_out)   selected by (b, k)
    y_ref[0, 0] = jnp.dot(x_ref[0], theta_ref[0],
                          preferred_element_type=jnp.float32)


def _graph_agg_kernel(chebT_ref, satT_ref, y_ref, out_ref, acc_ref):
    # chebT_ref: (1, N, N)            == T_k^T          (selected by k)
    # satT_ref:  (1, N, N)            == SAt[b]^T       (selected by b)
    # y_ref:     (1, 1, N, T*F_out)                     (selected by (b, k))
    # out_ref:   (1, N, T*F_out)      accumulator output (selected by b)
    # acc_ref:   (N, T*F_out) f32 VMEM scratch
    k = pl.program_id(1)

    @pl.when(k == 0)
    def _():
        acc_ref[...] = jnp.zeros_like(acc_ref)

    # (T_k * SAt[b])^T == T_k^T * SAt[b]^T  (elementwise), so no in-kernel
    # transpose is needed; the transposes are done once in the wrapper.
    a_t = chebT_ref[0] * satT_ref[0]                       # (N, N)
    acc_ref[...] += jnp.dot(a_t, y_ref[0, 0],
                            preferred_element_type=jnp.float32)

    @pl.when(k == pl.num_programs(1) - 1)
    def _():
        out_ref[0] = jnp.maximum(acc_ref[...], 0.0).astype(out_ref.dtype)


# ----------------------------- wrapper ---------------------------------------

def cheb_conv_with_sat(x, spatial_attention, cheb_polynomials, theta):
    """Forward pass of cheb_conv_withSAt.

    x:                 (B, N, F_in, T)  float32
    spatial_attention: (B, N, N)        float32
    cheb_polynomials:  (K, N, N)        float32
    theta:             (K, F_in, F_out) float32  (stacked Theta ParameterList)
    returns:           (B, N, F_out, T) float32
    """
    B, N, F_in, T = x.shape
    K = cheb_polynomials.shape[0]
    F_out = theta.shape[-1]
    M = N * T
    f32 = jnp.float32

    # (B, N, F_in, T) -> (B, N, T, F_in) -> (B, N*T, F_in)
    x_flat = jnp.transpose(x.astype(f32), (0, 1, 3, 2)).reshape(B, M, F_in)
    theta = theta.astype(f32)

    # ---- stage 1: Y[b, k] = Xflat[b] @ Theta_k ------------------------------
    y = pl.pallas_call(
        _theta_proj_kernel,
        out_shape=jax.ShapeDtypeStruct((B, K, M, F_out), f32),
        grid_spec=pltpu.PrefetchScalarGridSpec(
            num_scalar_prefetch=0,
            grid=(B, K),
            in_specs=[
                pl.BlockSpec((1, M, F_in), lambda b, k: (b, 0, 0)),
                pl.BlockSpec((1, F_in, F_out), lambda b, k: (k, 0, 0)),
            ],
            out_specs=pl.BlockSpec((1, 1, M, F_out),
                                   lambda b, k: (b, k, 0, 0)),
        ),
        compiler_params=pltpu.CompilerParams(
            dimension_semantics=("parallel", "parallel")),
    )(x_flat, theta)

    # Pure row-major metadata reshape: Y[b,k,n*T+t,o] -> Yr[b,k,n,t*F_out+o]
    y_r = y.reshape(B, K, N, T * F_out)

    chebT = jnp.transpose(cheb_polynomials.astype(f32), (0, 2, 1))
    satT = jnp.transpose(spatial_attention.astype(f32), (0, 2, 1))

    # ---- stage 2: out[b] = relu(sum_k (T_k*SAt[b])^T @ Yr[b,k]) -------------
    out_flat = pl.pallas_call(
        _graph_agg_kernel,
        out_shape=jax.ShapeDtypeStruct((B, N, T * F_out), f32),
        grid_spec=pltpu.PrefetchScalarGridSpec(
            num_scalar_prefetch=0,
            grid=(B, K),
            in_specs=[
                pl.BlockSpec((1, N, N), lambda b, k: (k, 0, 0)),
                pl.BlockSpec((1, N, N), lambda b, k: (b, 0, 0)),
                pl.BlockSpec((1, 1, N, T * F_out), lambda b, k: (b, k, 0, 0)),
            ],
            out_specs=pl.BlockSpec((1, N, T * F_out), lambda b, k: (b, 0, 0)),
            scratch_shapes=[pltpu.VMEM((N, T * F_out), f32)],
        ),
        compiler_params=pltpu.CompilerParams(
            dimension_semantics=("parallel", "arbitrary")),
    )(chebT, satT, y_r)

    # (B, N, T*F_out) -> (B, N, T, F_out) -> (B, N, F_out, T)
    return out_flat.reshape(B, N, T, F_out).transpose(0, 1, 3, 2)


# ----------------------------- test harness ----------------------------------

def _cheb_polynomial_np(L_tilde, K):
    # Mirrors the module's cheb_polynomial (note: elementwise `*` recurrence,
    # exactly as written in the reference code).
    N = L_tilde.shape[0]
    polys = [np.identity(N, dtype=np.float32),
             np.asarray(L_tilde, dtype=np.float32)]
    for i in range(2, K):
        polys.append(
            np.asarray(2 * L_tilde * polys[i - 1] - polys[i - 2],
                       dtype=np.float32))
    return np.stack(polys[:max(K, 2)], axis=0).astype(np.float32)[:K]


def _reference_forward(x, sat, cheb, theta):
    # Plain-numpy transcription of the PyTorch forward.
    B, N, F_in, T = x.shape
    K = cheb.shape[0]
    F_out = theta.shape[-1]
    out = np.zeros((B, N, F_out, T), dtype=np.float32)
    for t in range(T):
        gs = x[:, :, :, t]                                    # (B, N, F_in)
        o = np.zeros((B, N, F_out), dtype=np.float32)
        for k in range(K):
            t_k_at = cheb[k][None, :, :] * sat                # (B, N, N)
            rhs = np.einsum('bjn,bjf->bnf', t_k_at, gs)       # permute(0,2,1) @ gs
            o = o + rhs @ theta[k]
        out[:, :, :, t] = o
    return np.maximum(out, 0.0)                               # relu


if __name__ == "__main__":
    B, N, F_in, F_out, T, K = 2, 16, 4, 8, 8, 3

    key = jax.random.PRNGKey(0)
    k_x, k_sat, k_w, k_theta = jax.random.split(key, 4)

    x = jax.random.normal(k_x, (B, N, F_in, T), dtype=jnp.float32)
    sat = jax.nn.softmax(
        jax.random.normal(k_sat, (B, N, N), dtype=jnp.float32), axis=-1)
    theta = 0.1 * jax.random.normal(k_theta, (K, F_in, F_out),
                                    dtype=jnp.float32)

    # Build cheb_polynomials the same way the module's __init__ would:
    # scaled Laplacian of a random symmetric adjacency, then the Chebyshev
    # recurrence as written in the reference code.
    # TODO(synk): the module uses scipy.sparse.linalg.eigs(L, k=1, 'LR') for
    # lambda_max; here (L symmetric) np.linalg.eigvalsh is equivalent and
    # avoids a scipy dependency — this is __init__-time host preprocessing,
    # not part of the kernel forward.
    w_rand = np.asarray(jax.random.uniform(k_w, (N, N), dtype=jnp.float32))
    W = (w_rand + w_rand.T) / 2.0
    np.fill_diagonal(W, 0.0)
    D = np.diag(W.sum(axis=1))
    L = (D - W).astype(np.float32)
    lambda_max = float(np.max(np.linalg.eigvalsh(L)))
    L_tilde = (2.0 * L / lambda_max - np.identity(N)).astype(np.float32)
    cheb = _cheb_polynomial_np(L_tilde, K)

    out = cheb_conv_with_sat(x, sat, jnp.asarray(cheb), theta)
    out = jax.block_until_ready(out)

    ref = _reference_forward(np.asarray(x), np.asarray(sat), cheb,
                             np.asarray(theta))
    np.testing.assert_allclose(np.asarray(out), ref, atol=2e-4, rtol=2e-4)
    print("KERNEL_OK")
</pallas_src>

<mosaic_0001>
module attributes {stable_mosaic.version = 11 : i64} {
  func.func @_theta_proj_kernel(%arg0: i32, %arg1: i32, %arg2: memref<1x128x4xf32, #tpu.memory_space<vmem>>, %arg3: memref<1x4x8xf32, #tpu.memory_space<vmem>>, %arg4: memref<1x1x128x8xf32, #tpu.memory_space<vmem>>) attributes {dimension_semantics = [#tpu.dimension_semantics<parallel>, #tpu.dimension_semantics<parallel>], iteration_bounds = array<i64: 2, 3>, scalar_prefetch = 0 : i64, scratch_operands = 0 : i64, tpu.core_type = #tpu.core_type<tc>, window_params = [{transform_indices = @transform_0, window_bounds = array<i64: 1, 128, 4>}, {transform_indices = @transform_1, window_bounds = array<i64: 1, 4, 8>}, {transform_indices = @transform_2, window_bounds = array<i64: 1, 1, 128, 8>}]} {
    %c0 = arith.constant 0 : index
    %c0_0 = arith.constant 0 : index
    %c0_1 = arith.constant 0 : index
    %0 = vector.load %arg2[%c0, %c0_0, %c0_1] : memref<1x128x4xf32, #tpu.memory_space<vmem>>, vector<1x128x4xf32>
    %1 = vector.shape_cast %0 : vector<1x128x4xf32> to vector<128x4xf32>
    %c0_2 = arith.constant 0 : index
    %c0_3 = arith.constant 0 : index
    %c0_4 = arith.constant 0 : index
    %2 = vector.load %arg3[%c0_2, %c0_3, %c0_4] : memref<1x4x8xf32, #tpu.memory_space<vmem>>, vector<1x4x8xf32>
    %3 = vector.shape_cast %2 : vector<1x4x8xf32> to vector<4x8xf32>
    %cst = arith.constant dense<0.000000e+00> : vector<128x8xf32>
    %4 = tpu.matmul %1, %3, %cst {dimension_numbers = #tpu.dot_dimension_numbers<[1], [0], [0], [1], [0, 0, 1, 1], [], []>} : vector<128x4xf32>, vector<4x8xf32>, vector<128x8xf32> -> vector<128x8xf32>
    %c0_5 = arith.constant 0 : index
    %c0_6 = arith.constant 0 : index
    %c0_7 = arith.constant 0 : index
    %c0_8 = arith.constant 0 : index
    %5 = vector.load %arg4[%c0_5, %c0_6, %c0_7, %c0_8] : memref<1x1x128x8xf32, #tpu.memory_space<vmem>>, vector<1x1x128x8xf32>
    %6 = vector.shape_cast %5 : vector<1x1x128x8xf32> to vector<128x8xf32>
    %7 = vector.shape_cast %4 : vector<128x8xf32> to vector<1x1x128x8xf32>
    tpu.vector_store %arg4[%c0_5, %c0_6, %c0_7, %c0_8], %7 {strides = array<i32>} : memref<1x1x128x8xf32, #tpu.memory_space<vmem>>, vector<1x1x128x8xf32>,
    return
  }
  func.func @transform_0(%arg0: i32, %arg1: i32) -> (i32, i32, i32) {
    %c0_i32 = arith.constant 0 : i32
    %c0_i32_0 = arith.constant 0 : i32
    %c0_i32_1 = arith.constant 0 : i32
    return %arg0, %c0_i32, %c0_i32_0 : i32, i32, i32
  }
  func.func @transform_1(%arg0: i32, %arg1: i32) -> (i32, i32, i32) {
    %c0_i32 = arith.constant 0 : i32
    %c0_i32_0 = arith.constant 0 : i32
    %c0_i32_1 = arith.constant 0 : i32
    return %arg1, %c0_i32, %c0_i32_0 : i32, i32, i32
  }
  func.func @transform_2(%arg0: i32, %arg1: i32) -> (i32, i32, i32, i32) {
    %c0_i32 = arith.constant 0 : i32
    %c0_i32_0 = arith.constant 0 : i32
    %c0_i32_1 = arith.constant 0 : i32
    return %arg0, %arg1, %c0_i32, %c0_i32_0 : i32, i32, i32, i32
  }
}

</mosaic_0001>

<llo_original>
// kernel: tpu_custom_call.1
$region0: #{tpu_custom_call.1}
  #allocation0 [shape = 'u32[]', space=smem, size = 0x4, offset = 0x4, fixed_abs, tag = 'smem constant byte address 0x4 - core index']
  #allocation1 [shape = 'u32[144,128]{1,0:T(1,128)}', space=vmem, size = 0x12000, scoped, tag = 'internal scratch']
  %s0 = inlined_call_operand.vmem [shape: f32[2,128,4], index: 0, kind: input, shape index: {}]
  %s1 = inlined_call_operand.vmem [shape: f32[3,4,8], index: 1, kind: input, shape index: {}]
  %s2 = inlined_call_operand.vmem [shape: f32[2,3,128,8], index: 2, kind: output, shape index: {}]
  %s3 = sld [smem:[#allocation0]]
  $region41: #{tpu_custom_call.1} parent=0
    _
  %s5 = ssub.s32 1, %s3
  %s6 = scalar_select 0, %s5, %s3
  loop: start=0, step=1, limit=8
  $region2: #{tpu_custom_call.1} parent=0 // loop_pre_header
    _
  $region3: #{tpu_custom_call.1} parent=0 // loop_header
    %s8 = sphi 0, %s12
    %p9 = scmp.ge.s32.totalorder %s8, 8
    %s15 = sphi 0, %s27
    %s16 = sphi 0, %s23
    %s17 = sphi 0, %s15
    %s18 = sphi 0, %s16
    %s19 = sphi 0, %s17
    %s20 = sphi 0, %s18
    %s30 = sphi 0, %s32
    %s33 = sphi 0, %s30
    %s34 = sphi 0, %s33
    %s50 = sphi 0, %s34
    %s56 = sphi 0, %s58
    %s59 = sphi 0, %s56
    %s60 = sphi 0, %s59
    %s76 = sphi 0, %s60
    %s84 = sphi 0, %s86
    %s87 = sphi 0, %s84
    %s88 = sphi 0, %s87
    %s104 = sphi 0, %s88
  $region4: #{tpu_custom_call.1} parent=0 // loop_header_branch
    %11 = sbr.rel (%p9) target = $region8
  $region5: #{tpu_custom_call.1} parent=0 // loop_body
    %s13 = ssub.s32 %s8, 1
    %s14 = ssub.s32 %s8, 2
    %s21 = sadd.s32 1, %s16
    %p22 = scmp.ge.s32.totalorder %s21, 3
    %s23 = scalar_select %p22, 0, %s21
    %s24 = sadd.s32 1, %s15
    %s25 = scalar_select %p22, %s24, %s15
    %p26 = scmp.ge.s32.totalorder %s25, 2
    %s27 = scalar_select %p26, 0, %s25
    %s28 = ssub.s32 %s15, %s27
    %p29 = scmp.eq.s32.totalorder %s28, 0
    %s31 = sadd.s32 %s30, 1
    %s32 = scalar_select %p29, %s30, %s31
    %p35 = pneg %p29
    %p36 = scmp.eq.s32.totalorder %s8, 5
    %p37 = por %p35, %p36
    %p38 = scmp.ne.s32.totalorder %s30, %s33
    %p39 = scmp.eq.s32.totalorder %s8, 0
    %p40 = por %p38, %p39
    %p41 = scmp.ne.s32.totalorder %s30, %s33
    %p42 = scmp.eq.s32.totalorder %s13, 5
    %p43 = por %p41, %p42
    %p44 = scmp.ne.s32.totalorder %s33, %s34
    %p45 = scmp.eq.s32.totalorder %s13, 0
    %p46 = por %p44, %p45
    %p47 = scmp.ne.s32.totalorder %s33, %s34
    %p48 = scmp.eq.s32.totalorder %s14, 5
    %p49 = por %p47, %p48
    %p51 = scmp.ne.s32.totalorder %s34, %s50
    %p52 = scmp.eq.s32.totalorder %s14, 0
    %p53 = por %p51, %p52
    %s54 = ssub.s32 %s16, %s23
    %p55 = scmp.eq.s32.totalorder %s54, 0
    %s57 = sadd.s32 %s56, 1
    %s58 = scalar_select %p55, %s56, %s57
    %p61 = pneg %p55
    %p62 = scmp.eq.s32.totalorder %s8, 5
    %p63 = por %p61, %p62
    %p64 = scmp.ne.s32.totalorder %s56, %s59
    %p65 = scmp.eq.s32.totalorder %s8, 0
    %p66 = por %p64, %p65
    %p67 = scmp.ne.s32.totalorder %s56, %s59
    %p68 = scmp.eq.s32.totalorder %s13, 5
    %p69 = por %p67, %p68
    %p70 = scmp.ne.s32.totalorder %s59, %s60
    %p71 = scmp.eq.s32.totalorder %s13, 0
    %p72 = por %p70, %p71
    %p73 = scmp.ne.s32.totalorder %s59, %s60
    %p74 = scmp.eq.s32.totalorder %s14, 5
    %p75 = por %p73, %p74
    %p77 = scmp.ne.s32.totalorder %s60, %s76
    %p78 = scmp.eq.s32.totalorder %s14, 0
    %p79 = por %p77, %p78
    %s80 = ssub.s32 %s15, %s27
    %s81 = ssub.s32 %s16, %s23
    %s82 = sor.u32 %s80, %s81
    %p83 = scmp.eq.s32.totalorder %s82, 0
    %s85 = sadd.s32 %s84, 1
    %s86 = scalar_select %p83, %s84, %s85
    %p89 = pneg %p83
    %p90 = scmp.eq.s32.totalorder %s8, 5
    %p91 = por %p89, %p90
    %p92 = scmp.ne.s32.totalorder %s84, %s87
    %p93 = scmp.eq.s32.totalorder %s8, 0
    %p94 = por %p92, %p93
    %p95 = scmp.ne.s32.totalorder %s84, %s87
    %p96 = scmp.eq.s32.totalorder %s13, 5
    %p97 = por %p95, %p96
    %p98 = scmp.ne.s32.totalorder %s87, %s88
    %p99 = scmp.eq.s32.totalorder %s13, 0
    %p100 = por %p98, %p99
    %p101 = scmp.ne.s32.totalorder %s87, %s88
    %p102 = scmp.eq.s32.totalorder %s14, 5
    %p103 = por %p101, %p102
    %p105 = scmp.ne.s32.totalorder %s88, %s104
    %p106 = scmp.eq.s32.totalorder %s14, 0
    %p107 = por %p105, %p106
    %p108 = scmp.le.s32.totalorder 1, %s8
    %p109 = scmp.lt.s32.totalorder %s8, 7
    %p110 = pnand %p108, %p109
    %p111 = pneg %p110
    // Predicated region
    $region9: #{tpu_custom_call.1} parent=5 // pred_check
      _
    $region10: #{tpu_custom_call.1} parent=5 // pred_check_branch
      %113 = sbr.rel (%p110) target = $region12
    $region11: #{tpu_custom_call.1} parent=5 // pred_region
      %s114 = ssub.s32 %s8, 1
    $region12: #{tpu_custom_call.1} parent=5 // pred_fallthru
      _
    %p115 = scmp.lt.s32.totalorder %s8, 6
    // Predicated region
    $region13: #{tpu_custom_call.1} parent=5 // pred_check
      %p116 = pneg %p115
    $region14: #{tpu_custom_call.1} parent=5 // pred_check_branch
      %118 = sbr.rel (%p116) target = $region16
    $region15: #{tpu_custom_call.1} parent=5 // pred_region
      // Predicated region
      $region17: #{tpu_custom_call.1} parent=15 // pred_check
        %p119 = pneg %p40
      $region18: #{tpu_custom_call.1} parent=15 // pred_check_branch
        %121 = sbr.rel (%p119) target = $region20
      $region19: #{tpu_custom_call.1} parent=15 // pred_region
        %p122 = scmp.lt.s32.totalorder %s15, 1
        %s123 = scalar_select %p122, %s15, 1
        %s124 = smul.addr %s123, 16
        %s125 = smul.addr %s124, 8
        %s126 = scalar_lea.vmem %s0, %s125
      $region20: #{tpu_custom_call.1} parent=15 // pred_fallthru
        _
      // Predicated region
      $region21: #{tpu_custom_call.1} parent=15 // pred_check
        %p127 = pneg %p66
      $region22: #{tpu_custom_call.1} parent=15 // pred_check_branch
        %129 = sbr.rel (%p127) target = $region24
      $region23: #{tpu_custom_call.1} parent=15 // pred_region
        %p130 = scmp.lt.s32.totalorder %s16, 2
        %s131 = scalar_select %p130, %s16, 2
        %s132 = smul.addr %s131, 4
        %s133 = scalar_lea.vmem %s1, %s132
      $region24: #{tpu_custom_call.1} parent=15 // pred_fallthru
        _
    $region16: #{tpu_custom_call.1} parent=5 // pred_fallthru
      _
    %p134 = scmp.le.s32.totalorder 1, %s8
    %p135 = scmp.lt.s32.totalorder %s8, 7
    %p136 = pnand %p134, %p135
    %p137 = pneg %p136
    // Predicated region
    $region25: #{tpu_custom_call.1} parent=5 // pred_check
      _
    $region26: #{tpu_custom_call.1} parent=5 // pred_check_branch
      %139 = sbr.rel (%p136) target = $region28
    $region27: #{tpu_custom_call.1} parent=5 // pred_region
      %s140 = ssub.s32 %s8, 1
      %p141 = scmp.lt.s32.totalorder %s17, 1
      %s142 = scalar_select %p141, %s17, 1
      %s143 = smul.addr %s142, 16
      %s144 = smul.addr %s143, 8
      %s145 = scalar_lea.vmem %s0, %s144
      %p146 = pneg %p46
      %p147 = pneg %p43
      %p148 = scmp.lt.s32.totalorder %s18, 2
      %s149 = scalar_select %p148, %s18, 2
      %s150 = smul.addr %s149, 4
      %s151 = scalar_lea.vmem %s1, %s150
      %p152 = pneg %p72
      %p153 = pneg %p69
      %p154 = pneg %p100
      %p155 = pneg %p97
      %p156 = scmp.lt.s32.totalorder %s17, 1
      %s157 = scalar_select %p156, %s17, 1
      %p158 = scmp.lt.s32.totalorder %s18, 2
      %s159 = scalar_select %p158, %s18, 2
      %s160 = smul.addr %s159, 16
      %s161 = smul.addr %s157, 48
      %s162 = sadd.s32 %s160, %s161
      %s163 = smul.addr %s162, 8
      %s164 = scalar_lea.vmem %s2, %s163
      %p165 = scmp.lt.s32.totalorder %s17, 1
      %s166 = scalar_select %p165, %s17, 1
      %s167 = smul.addr %s166, 16
      %s168 = smul.addr %s167, 8
      %s169 = scalar_lea.vmem %s0, %s168
      %p170 = scmp.lt.s32.totalorder %s18, 2
      %s171 = scalar_select %p170, %s18, 2
      %s172 = smul.addr %s171, 4
      %s173 = scalar_lea.vmem %s1, %s172
      %p174 = scmp.lt.s32.totalorder %s17, 1
      %s175 = scalar_select %p174, %s17, 1
      %p176 = scmp.lt.s32.totalorder %s18, 2
      %s177 = scalar_select %p176, %s18, 2
      %s178 = smul.addr %s177, 16
      %s179 = smul.addr %s175, 48
      %s180 = sadd.s32 %s178, %s179
      %s181 = smul.addr %s180, 8
      %s182 = scalar_lea.vmem %s2, %s181
      %v183 = vld [vmem:[%s169] sm:$0xff]
      %v184 = vld [vmem:[%s169 + $0x8] sm:$0xff]
      %v185 = vld [vmem:[%s169 + $0x10] sm:$0xff]
      %v186 = vld [vmem:[%s169 + $0x18] sm:$0xff]
      %v187 = vld [vmem:[%s169 + $0x20] sm:$0xff]
      %v188 = vld [vmem:[%s169 + $0x28] sm:$0xff]
      %v189 = vld [vmem:[%s169 + $0x30] sm:$0xff]
      %v190 = vld [vmem:[%s169 + $0x38] sm:$0xff]
      %v191 = vld [vmem:[%s169 + $0x40] sm:$0xff]
      %v192 = vld [vmem:[%s169 + $0x48] sm:$0xff]
      %v193 = vld [vmem:[%s169 + $0x50] sm:$0xff]
      %v194 = vld [vmem:[%s169 + $0x58] sm:$0xff]
      %v195 = vld [vmem:[%s169 + $0x60] sm:$0xff]
      %v196 = vld [vmem:[%s169 + $0x68] sm:$0xff]
      %v197 = vld [vmem:[%s169 + $0x70] sm:$0xff]
      %v198 = vld [vmem:[%s169 + $0x78] sm:$0xff]
      %v199 = vld [vmem:[%s173] sm:$0xf]
      %vm200 = vcmask 31744
      %v202 = vsel %vm200, %v183, 0
      %v205 = vsel %vm200, %v184, 0
      %v208 = vsel %vm200, %v185, 0
      %v211 = vsel %vm200, %v186, 0
      %v214 = vsel %vm200, %v187, 0
      %v217 = vsel %vm200, %v188, 0
      %v220 = vsel %vm200, %v189, 0
      %v223 = vsel %vm200, %v190, 0
      %v226 = vsel %vm200, %v191, 0
      %v229 = vsel %vm200, %v192, 0
      %v232 = vsel %vm200, %v193, 0
      %v235 = vsel %vm200, %v194, 0
      %v238 = vsel %vm200, %v195, 0
      %v241 = vsel %vm200, %v196, 0
      %v244 = vsel %vm200, %v197, 0
      %v247 = vsel %vm200, %v198, 0
      %vm249 = vcmask 1043456
      %v251 = vsel %vm249, %v199, 0
      %253 = vmatprep.subr.mxu0 0.0
      %254 = vmatpush1.msra.mxu0 %v251
      %255 = vmatprep.subr.mxu0 0.0
      %256 = vmatpush1.msra.mxu0 0.0
      %257 = vmatprep.subr.mxu0 0.0
      %258 = vmatpush1.msra.mxu0 0.0
      %259 = vmatprep.subr.mxu0 0.0
      %260 = vmatpush1.msra.mxu0 0.0
      %261 = vmatprep.subr.mxu0 0.0
      %262 = vmatpush1.msra.mxu0 0.0
      %263 = vmatprep.subr.mxu0 0.0
      %264 = vmatpush1.msra.mxu0 0.0
      %265 = vmatprep.subr.mxu0 0.0
      %266 = vmatpush1.msra.mxu0 0.0
      %267 = vmatprep.subr.mxu0 0.0
      %268 = vmatpush1.msra.mxu0 0.0
      %269 = vmatprep.subr.mxu0 0.0
      %270 = vmatpush1.msra.mxu0 0.0
      %271 = vmatprep.subr.mxu0 0.0
      %272 = vmatpush1.msra.mxu0 0.0
      %273 = vmatprep.subr.mxu0 0.0
      %274 = vmatpush1.msra.mxu0 0.0
      %275 = vmatprep.subr.mxu0 0.0
      %276 = vmatpush1.msra.mxu0 0.0
      %277 = vmatprep.subr.mxu0 0.0
      %278 = vmatpush1.msra.mxu0 0.0
      %279 = vmatprep.subr.mxu0 0.0
      %280 = vmatpush1.msra.mxu0 0.0
      %281 = vmatprep.subr.mxu0 0.0
      %282 = vmatpush1.msra.mxu0 0.0
      %283 = vmatprep.subr.mxu0 0.0
      %284 = vmatpush1.msra.mxu0 0.0
      %285 = vmatprep.subr.mxu0 0.0
      %286 = vmatpush1.msra.mxu0 0.0
      %287 = vmatprep.subr.mxu0 0.0
      %288 = vmatpush1.msra.mxu0 0.0
      %289 = vmatprep.subr.mxu0 0.0
      %290 = vmatpush1.msra.mxu0 0.0
      %291 = vmatprep.subr.mxu0 0.0
      %292 = vmatpush1.msra.mxu0 0.0
      %293 = vmatprep.subr.mxu0 0.0
      %294 = vmatpush1.msra.mxu0 0.0
      %295 = vmatprep.subr.mxu0 0.0
      %296 = vmatpush1.msra.mxu0 0.0
      %297 = vmatprep.subr.mxu0 0.0
      %298 = vmatpush1.msra.mxu0 0.0
      %299 = vmatprep.subr.mxu0 0.0
      %300 = vmatpush1.msra.mxu0 0.0
      %301 = vmatprep.subr.mxu0 0.0
      %302 = vmatpush1.msra.mxu0 0.0
      %303 = vmatprep.subr.mxu0 0.0
      %304 = vmatpush1.msra.mxu0 0.0
      %305 = vmatprep.subr.mxu0 0.0
      %306 = vmatpush1.msra.mxu0 0.0
      %307 = vmatprep.subr.mxu0 0.0
      %308 = vmatpush1.msra.mxu0 0.0
      %309 = vmatprep.subr.mxu0 0.0
      %310 = vmatpush1.msra.mxu0 0.0
      %311 = vmatprep.subr.mxu0 0.0
      %312 = vmatpush1.msra.mxu0 0.0
      %313 = vmatprep.subr.mxu0 0.0
      %314 = vmatpush1.msra.mxu0 0.0
      %315 = vmatprep.subr.mxu0 0.0
      %316 = vmatpush1.msra.mxu0 0.0
      %317 = vmatprep.mubr.f32.mxu0 0.0
      %318 = vmatmul.mubr.f32.gmra.mrb[0].mxu0 %v202
      %v319 = vpop.f32.mrb[0].mxu0
      %v320 = vadd.f32 0.0, %v319
      %v321 = vpop.f32.mrb[0].mxu0
      %322 = vmatprep.mubr.f32.mxu0 0.0
      %323 = vmatmul.mubr.f32.gmra.mrb[0].mxu0 %v205
      %v324 = vpop.f32.mrb[0].mxu0
      %v325 = vadd.f32 0.0, %v324
      %v326 = vpop.f32.mrb[0].mxu0
      %327 = vmatprep.mubr.f32.mxu0 0.0
      %328 = vmatmul.mubr.f32.gmra.mrb[0].mxu0 %v208
      %v329 = vpop.f32.mrb[0].mxu0
      %v330 = vadd.f32 0.0, %v329
      %v331 = vpop.f32.mrb[0].mxu0
      %332 = vmatprep.mubr.f32.mxu0 0.0
      %333 = vmatmul.mubr.f32.gmra.mrb[0].mxu0 %v211
      %v334 = vpop.f32.mrb[0].mxu0
      %v335 = vadd.f32 0.0, %v334
      %v336 = vpop.f32.mrb[0].mxu0
      %337 = vmatprep.mubr.f32.mxu0 0.0
      %338 = vmatmul.mubr.f32.gmra.mrb[0].mxu0 %v214
      %v339 = vpop.f32.mrb[0].mxu0
      %v340 = vadd.f32 0.0, %v339
      %v341 = vpop.f32.mrb[0].mxu0
      %342 = vmatprep.mubr.f32.mxu0 0.0
      %343 = vmatmul.mubr.f32.gmra.mrb[0].mxu0 %v217
      %v344 = vpop.f32.mrb[0].mxu0
      %v345 = vadd.f32 0.0, %v344
      %v346 = vpop.f32.mrb[0].mxu0
      %347 = vmatprep.mubr.f32.mxu0 0.0
      %348 = vmatmul.mubr.f32.gmra.mrb[0].mxu0 %v220
      %v349 = vpop.f32.mrb[0].mxu0
      %v350 = vadd.f32 0.0, %v349
      %v351 = vpop.f32.mrb[0].mxu0
      %352 = vmatprep.mubr.f32.mxu0 0.0
      %353 = vmatmul.mubr.f32.gmra.mrb[0].mxu0 %v223
      %v354 = vpop.f32.mrb[0].mxu0
      %v355 = vadd.f32 0.0, %v354
      %v356 = vpop.f32.mrb[0].mxu0
      %357 = vmatprep.mubr.f32.mxu0 0.0
      %358 = vmatmul.mubr.f32.gmra.mrb[0].mxu0 %v226
      %v359 = vpop.f32.mrb[0].mxu0
      %v360 = vadd.f32 0.0, %v359
      %v361 = vpop.f32.mrb[0].mxu0
      %362 = vmatprep.mubr.f32.mxu0 0.0
      %363 = vmatmul.mubr.f32.gmra.mrb[0].mxu0 %v229
      %v364 = vpop.f32.mrb[0].mxu0
      %v365 = vadd.f32 0.0, %v364
      %v366 = vpop.f32.mrb[0].mxu0
      %367 = vmatprep.mubr.f32.mxu0 0.0
      %368 = vmatmul.mubr.f32.gmra.mrb[0].mxu0 %v232
      %v369 = vpop.f32.mrb[0].mxu0
      %v370 = vadd.f32 0.0, %v369
      %v371 = vpop.f32.mrb[0].mxu0
      %372 = vmatprep.mubr.f32.mxu0 0.0
      %373 = vmatmul.mubr.f32.gmra.mrb[0].mxu0 %v235
      %v374 = vpop.f32.mrb[0].mxu0
      %v375 = vadd.f32 0.0, %v374
      %v376 = vpop.f32.mrb[0].mxu0
      %377 = vmatprep.mubr.f32.mxu0 0.0
      %378 = vmatmul.mubr.f32.gmra.mrb[0].mxu0 %v238
      %v379 = vpop.f32.mrb[0].mxu0
      %v380 = vadd.f32 0.0, %v379
      %v381 = vpop.f32.mrb[0].mxu0
      %382 = vmatprep.mubr.f32.mxu0 0.0
      %383 = vmatmul.mubr.f32.gmra.mrb[0].mxu0 %v241
      %v384 = vpop.f32.mrb[0].mxu0
      %v385 = vadd.f32 0.0, %v384
      %v386 = vpop.f32.mrb[0].mxu0
      %387 = vmatprep.mubr.f32.mxu0 0.0
      %388 = vmatmul.mubr.f32.gmra.mrb[0].mxu0 %v244
      %v389 = vpop.f32.mrb[0].mxu0
      %v390 = vadd.f32 0.0, %v389
      %v391 = vpop.f32.mrb[0].mxu0
      %392 = vmatprep.mubr.f32.mxu0 0.0
      %393 = vmatmul.mubr.f32.gmra.mrb[0].mxu0 %v247
      %v394 = vpop.f32.mrb[0].mxu0
      %v395 = vadd.f32 0.0, %v394
      %v396 = vpop.f32.mrb[0].mxu0
      %397 = vdwg.mxu0
      %vm398 = vcmask 64512
      %399 = vst.msk [vmem:[%s182] sm:$0xff] %vm398, %v320
      %400 = vst.msk [vmem:[%s182 + $0x8] sm:$0xff] %vm398, %v325
      %401 = vst.msk [vmem:[%s182 + $0x10] sm:$0xff] %vm398, %v330
      %402 = vst.msk [vmem:[%s182 + $0x18] sm:$0xff] %vm398, %v335
      %403 = vst.msk [vmem:[%s182 + $0x20] sm:$0xff] %vm398, %v340
      %404 = vst.msk [vmem:[%s182 + $0x28] sm:$0xff] %vm398, %v345
      %405 = vst.msk [vmem:[%s182 + $0x30] sm:$0xff] %vm398, %v350
      %406 = vst.msk [vmem:[%s182 + $0x38] sm:$0xff] %vm398, %v355
      %407 = vst.msk [vmem:[%s182 + $0x40] sm:$0xff] %vm398, %v360
      %408 = vst.msk [vmem:[%s182 + $0x48] sm:$0xff] %vm398, %v365
      %409 = vst.msk [vmem:[%s182 + $0x50] sm:$0xff] %vm398, %v370
      %410 = vst.msk [vmem:[%s182 + $0x58] sm:$0xff] %vm398, %v375
      %411 = vst.msk [vmem:[%s182 + $0x60] sm:$0xff] %vm398, %v380
      %412 = vst.msk [vmem:[%s182 + $0x68] sm:$0xff] %vm398, %v385
      %413 = vst.msk [vmem:[%s182 + $0x70] sm:$0xff] %vm398, %v390
      %414 = vst.msk [vmem:[%s182 + $0x78] sm:$0xff] %vm398, %v395
      %p415 = scmp.lt.s32.totalorder %s17, 1
      %s416 = scalar_select %p415, %s17, 1
      %p417 = scmp.lt.s32.totalorder %s18, 2
      %s418 = scalar_select %p417, %s18, 2
      %s419 = smul.addr %s418, 16
      %s420 = smul.addr %s416, 48
      %s421 = sadd.s32 %s419, %s420
      %s422 = smul.addr %s421, 8
      %s423 = scalar_lea.vmem %s2, %s422
      // Predicated region
      $region29: #{tpu_custom_call.1} parent=27 // pred_check
        %p424 = pneg %p97
      $region30: #{tpu_custom_call.1} parent=27 // pred_check_branch
        %426 = sbr.rel (%p424) target = $region32
      $region31: #{tpu_custom_call.1} parent=27 // pred_region
        _
      $region32: #{tpu_custom_call.1} parent=27 // pred_fallthru
        _
    $region28: #{tpu_custom_call.1} parent=5 // pred_fallthru
      _
    %p427 = scmp.le.s32.totalorder 2, %s8
    // Predicated region
    $region33: #{tpu_custom_call.1} parent=5 // pred_check
      %p428 = pneg %p427
    $region34: #{tpu_custom_call.1} parent=5 // pred_check_branch
      %430 = sbr.rel (%p428) target = $region36
    $region35: #{tpu_custom_call.1} parent=5 // pred_region
      %s431 = ssub.s32 %s8, 2
      // Predicated region
      $region37: #{tpu_custom_call.1} parent=35 // pred_check
        %p432 = pneg %p103
      $region38: #{tpu_custom_call.1} parent=35 // pred_check_branch
        %434 = sbr.rel (%p432) target = $region40
      $region39: #{tpu_custom_call.1} parent=35 // pred_region
        %p435 = scmp.lt.s32.totalorder %s19, 1
        %s436 = scalar_select %p435, %s19, 1
        %p437 = scmp.lt.s32.totalorder %s20, 2
        %s438 = scalar_select %p437, %s20, 2
        %s439 = smul.addr %s438, 16
        %s440 = smul.addr %s436, 48
        %s441 = sadd.s32 %s439, %s440
        %s442 = smul.addr %s441, 8
        %s443 = scalar_lea.vmem %s2, %s442
      $region40: #{tpu_custom_call.1} parent=35 // pred_fallthru
        _
    $region36: #{tpu_custom_call.1} parent=5 // pred_fallthru
      _
  $region6: #{tpu_custom_call.1} parent=0 // loop_footer
    %s12 = sadd.s32 1, %s8
  $region7: #{tpu_custom_call.1} parent=0 // loop_footer_branch
    %7 = sbr.rel target = $region3
  $region8: #{tpu_custom_call.1} parent=0 // loop_exit
    _

</llo_original>
